<compile_context>
chip_gen: v6e
topology: v6e:2x2x1
jax: 0.10.0
libtpu: 0.0.40
codegen_flags: <defaults>
</compile_context>

<pallas_src>
import jax
import jax.numpy as jnp
import numpy as np
from jax.experimental import pallas as pl
from jax.experimental.pallas import tpu as pltpu

BN_EPS = 1e-5


def _round_up(x, m):
    return (x + m - 1) // m * m


def _stats_kernel(xc_ref, w_ref, sum_ref, sq_ref):
    """Phase 1: accumulate per-channel sum / sum-of-squares of z = W_bd @ relu(xc).

    The accumulator output blocks are indexed by the batch axis only, so the tile
    axis ("arbitrary", last) reduces into resident blocks while the batch axis
    stays embarrassingly parallel (megacore-friendly on v7x)."""
    @pl.when(pl.program_id(1) == 0)
    def _init():
        sum_ref[...] = jnp.zeros_like(sum_ref)
        sq_ref[...] = jnp.zeros_like(sq_ref)

    x = jnp.maximum(xc_ref[...], 0).astype(w_ref.dtype)   # ReLU (zero padding stays zero)
    z = jnp.dot(w_ref[...], x, preferred_element_type=jnp.float32)
    sum_ref[...] += jnp.sum(z, axis=1, keepdims=True)
    sq_ref[...] += jnp.sum(z * z, axis=1, keepdims=True)


def _normalize_kernel(xc_ref, w_ref, scale_ref, shift_ref, o_ref):
    """Phase 2: recompute z for this tile and apply the folded BN as a single FMA."""
    x = jnp.maximum(xc_ref[...], 0).astype(w_ref.dtype)
    z = jnp.dot(w_ref[...], x, preferred_element_type=jnp.float32)
    o_ref[...] = (z * scale_ref[...] + shift_ref[...]).astype(o_ref.dtype)


def factorized_reduce(x_nchw, w1, w2, gamma, beta, *, tile_m=None, act_dtype=None):
    """FactorizedReduce forward.

    x_nchw : (N, C_in, H, W)    (H, W even)
    w1, w2 : (C_out//2, C_in)   squeezed 1x1-conv weights (stride 2, no bias)
    gamma, beta : (C_out,)      BatchNorm affine parameters
    """
    N, C_in, H, W = x_nchw.shape
    assert H % 2 == 0 and W % 2 == 0, "FactorizedReduce assumes even spatial dims"
    C_half = w1.shape[0]
    C_out = 2 * C_half
    Ho, Wo = H // 2, W // 2
    HW = Ho * Wo

    out_dtype = x_nchw.dtype
    act_dtype = jnp.dtype(out_dtype if act_dtype is None else act_dtype)
    act_bytes = act_dtype.itemsize
    out_bytes = jnp.dtype(out_dtype).itemsize

    # sublane granularity: 8 for 32-bit, 16 for packed bf16 activations
    c_sub = 16 if act_bytes == 2 else 8
    C2 = 2 * C_in
    C2p = _round_up(C2, c_sub)
    Coutp = _round_up(C_out, 8)

    # ---- generation-aware VMEM budget (don't assume the 16/32 MiB scoped
    # defaults; include the double-buffered weight block; v7x only has 64 MiB).
    try:
        vmem_cap = int(pltpu.get_tpu_info().vmem_capacity_bytes)
    except Exception:
        vmem_cap = 64 * 1024 * 1024            # conservative: v7x per-TensorCore VMEM
    vmem_budget = int(vmem_cap * 0.70)         # headroom for Mosaic scratch / semaphores

    w_block_bytes = 2 * Coutp * C2p * act_bytes          # weight is double-buffered too
    ch_block_bytes = 2 * 2 * Coutp * 4                   # scale/shift blocks (phase 2)
    fixed_bytes = w_block_bytes + ch_block_bytes + (1 << 20)
    per_col = 2 * (C2p * act_bytes + Coutp * max(out_bytes, 4))   # dbl-buffered in + out
    max_tile = max(128, (vmem_budget - fixed_bytes) // per_col)
    max_tile = min(2048, max_tile // 128 * 128)          # diminishing returns past ~1-2k

    if tile_m is None:
        if HW <= max_tile:
            tile_m = HW                                   # single tile: no M padding at all
        else:
            tile_m = max_tile
            for cand in range(max_tile, 127, -128):       # prefer an exact divisor of HW
                if HW % cand == 0:
                    tile_m = cand
                    break
    Mp = _round_up(HW, tile_m)
    num_tiles = Mp // tile_m

    required = fixed_bytes + per_col * tile_m + (2 << 20)
    vmem_limit = int(min(int(vmem_cap * 0.9), max(vmem_budget, required)))

    # ---- layout glue (one fused XLA pass under jit: stride-2 gather + channel
    # concat + flatten + pad).  TODO(synk): fuse into the kernels (manual DMA).
    x1 = x_nchw[:, :, 0::2, 0::2]
    x2 = x_nchw[:, :, 1::2, 1::2]
    xc = jnp.concatenate([x1, x2], axis=1).reshape(N, C2, HW)
    xc_p = jnp.pad(xc, ((0, 0), (0, C2p - C2), (0, Mp - HW))).astype(act_dtype)

    # block-diagonal weight: one matmul produces the already-concatenated [z1; z2].
    w_bd = jnp.zeros((Coutp, C2p), jnp.float32)
    w_bd = w_bd.at[:C_half, :C_in].set(w1.astype(jnp.float32))
    w_bd = w_bd.at[C_half:C_out, C_in:C2].set(w2.astype(jnp.float32))
    w_bd = w_bd.astype(act_dtype)

    grid = (N, num_tiles)
    xc_spec = pl.BlockSpec((None, C2p, tile_m), lambda n, t: (n, 0, t))
    w_spec = pl.BlockSpec((Coutp, C2p), lambda n, t: (0, 0))
    ch_spec = pl.BlockSpec((Coutp, 1), lambda n, t: (0, 0))
    acc_spec = pl.BlockSpec((None, Coutp, 1), lambda n, t: (n, 0, 0))

    # ---- phase 1: per-batch partial per-channel sum / sumsq.
    psum, psq = pl.pallas_call(
        _stats_kernel,
        out_shape=(jax.ShapeDtypeStruct((N, Coutp, 1), jnp.float32),
                   jax.ShapeDtypeStruct((N, Coutp, 1), jnp.float32)),
        grid_spec=pltpu.PrefetchScalarGridSpec(
            num_scalar_prefetch=0,
            grid=grid,
            in_specs=[xc_spec, w_spec],
            out_specs=(acc_spec, acc_spec),
        ),
        compiler_params=pltpu.CompilerParams(
            dimension_semantics=("parallel", "arbitrary"),
            vmem_limit_bytes=vmem_limit),
    )(xc_p, w_bd)

    # ---- tiny wrapper-side fold: N-reduction + training-mode BN + affine folded
    # into one per-channel scale/shift (C_out elements -> negligible cost).
    inv_count = 1.0 / float(N * HW)
    mean = jnp.sum(psum, axis=0) * inv_count                     # (Coutp, 1)
    var = jnp.maximum(jnp.sum(psq, axis=0) * inv_count - mean * mean, 0.0)
    inv_std = jax.lax.rsqrt(var + BN_EPS)
    gamma_p = jnp.pad(gamma.astype(jnp.float32), (0, Coutp - C_out),
                      constant_values=1.0).reshape(Coutp, 1)
    beta_p = jnp.pad(beta.astype(jnp.float32), (0, Coutp - C_out)).reshape(Coutp, 1)
    scale = gamma_p * inv_std
    shift = beta_p - mean * scale

    # ---- phase 2: recompute z per tile + folded-BN FMA (fully parallel grid).
    out_spec = pl.BlockSpec((None, Coutp, tile_m), lambda n, t: (n, 0, t))
    out_p = pl.pallas_call(
        _normalize_kernel,
        out_shape=jax.ShapeDtypeStruct((N, Coutp, Mp), out_dtype),
        grid_spec=pltpu.PrefetchScalarGridSpec(
            num_scalar_prefetch=0,
            grid=grid,
            in_specs=[xc_spec, w_spec, ch_spec, ch_spec],
            out_specs=out_spec,
        ),
        compiler_params=pltpu.CompilerParams(
            dimension_semantics=("parallel", "parallel"),
            vmem_limit_bytes=vmem_limit),
    )(xc_p, w_bd, scale, shift)

    # metadata-only when Coutp == C_out and Mp == HW (the common / demo case).
    return out_p[:, :C_out, :HW].reshape(N, C_out, Ho, Wo)


def _reference(x_nchw, w1, w2, gamma, beta):
    """Pure-JAX reference mirroring the PyTorch forward (training-mode BN)."""
    x = jnp.maximum(x_nchw, 0.0)
    x1 = x[:, :, ::2, ::2]
    x2 = x[:, :, 1::2, 1::2]
    z1 = jnp.einsum('nchw,oc->nohw', x1, w1)
    z2 = jnp.einsum('nchw,oc->nohw', x2, w2)
    z = jnp.concatenate([z1, z2], axis=1)
    mean = jnp.mean(z, axis=(0, 2, 3), keepdims=True)
    var = jnp.mean((z - mean) ** 2, axis=(0, 2, 3), keepdims=True)
    y = (z - mean) / jnp.sqrt(var + BN_EPS)
    return y * gamma.reshape(1, -1, 1, 1) + beta.reshape(1, -1, 1, 1)


if __name__ == "__main__":
    # Small shapes consistent with the module: N=2, C_in=4, H=W=16, C_out=8
    N, C_in, H, W = 2, 4, 16, 16
    C_out = 8
    C_half = C_out // 2

    key = jax.random.PRNGKey(0)
    kx, k1, k2 = jax.random.split(key, 3)
    x = jax.random.normal(kx, (N, C_in, H, W), dtype=jnp.float32)
    # Conv2d weights are (C_out//2, C_in, 1, 1) in torch; stored squeezed here.
    w1 = jax.random.normal(k1, (C_half, C_in), dtype=jnp.float32) * 0.1
    w2 = jax.random.normal(k2, (C_half, C_in), dtype=jnp.float32) * 0.1
    # non-trivial BN affine params to exercise the folded scale/shift path
    gamma = 1.0 + 0.1 * jnp.arange(C_out, dtype=jnp.float32)
    beta = 0.05 * jnp.arange(C_out, dtype=jnp.float32)

    fr = jax.jit(factorized_reduce)
    out = jax.block_until_ready(fr(x, w1, w2, gamma, beta))

    ref = _reference(x, w1, w2, gamma, beta)
    assert out.shape == (N, C_out, H // 2, W // 2), out.shape
    np.testing.assert_allclose(np.asarray(out), np.asarray(ref), atol=1e-4, rtol=1e-4)

    print("KERNEL_OK")
</pallas_src>

<mosaic_0001>
module attributes {stable_mosaic.version = 11 : i64} {
  func.func @_stats_kernel(%arg0: i32, %arg1: i32, %arg2: memref<1x8x64xf32, #tpu.memory_space<vmem>>, %arg3: memref<8x8xf32, #tpu.memory_space<vmem>>, %arg4: memref<1x8x1xf32, #tpu.memory_space<vmem>>, %arg5: memref<1x8x1xf32, #tpu.memory_space<vmem>>) attributes {dimension_semantics = [#tpu.dimension_semantics<parallel>, #tpu.dimension_semantics<arbitrary>], iteration_bounds = array<i64: 2, 1>, scalar_prefetch = 0 : i64, scratch_operands = 0 : i64, tpu.core_type = #tpu.core_type<tc>, window_params = [{transform_indices = @transform_0, window_bounds = array<i64: 1, 8, 64>}, {pipeline_mode = #tpu.pipeline_mode<synchronous>, transform_indices = @transform_1, window_bounds = array<i64: 8, 8>}, {transform_indices = @transform_2, window_bounds = array<i64: 1, 8, 1>}, {transform_indices = @transform_3, window_bounds = array<i64: 1, 8, 1>}]} {
    %c0_i32 = arith.constant 0 : i32
    %0 = arith.cmpi eq, %arg1, %c0_i32 : i32
    %1 = arith.extui %0 : i1 to i32
    %c0_i32_0 = arith.constant 0 : i32
    %2 = arith.cmpi ne, %1, %c0_i32_0 : i32
    scf.if %2 {
      %cst_20 = arith.constant 0.000000e+00 : f32
      %26 = vector.broadcast %cst_20 : f32 to vector<8x1xf32>
      %c0_21 = arith.constant 0 : index
      %c0_22 = arith.constant 0 : index
      %c0_23 = arith.constant 0 : index
      %27 = vector.load %arg4[%c0_21, %c0_22, %c0_23] : memref<1x8x1xf32, #tpu.memory_space<vmem>>, vector<1x8x1xf32>
      %28 = vector.shape_cast %27 : vector<1x8x1xf32> to vector<8x1xf32>
      %29 = vector.shape_cast %26 : vector<8x1xf32> to vector<1x8x1xf32>
      tpu.vector_store %arg4[%c0_21, %c0_22, %c0_23], %29 {strides = array<i32>} : memref<1x8x1xf32, #tpu.memory_space<vmem>>, vector<1x8x1xf32>,
      %cst_24 = arith.constant 0.000000e+00 : f32
      %30 = vector.broadcast %cst_24 : f32 to vector<8x1xf32>
      %c0_25 = arith.constant 0 : index
      %c0_26 = arith.constant 0 : index
      %c0_27 = arith.constant 0 : index
      %31 = vector.load %arg5[%c0_25, %c0_26, %c0_27] : memref<1x8x1xf32, #tpu.memory_space<vmem>>, vector<1x8x1xf32>
      %32 = vector.shape_cast %31 : vector<1x8x1xf32> to vector<8x1xf32>
      %33 = vector.shape_cast %30 : vector<8x1xf32> to vector<1x8x1xf32>
      tpu.vector_store %arg5[%c0_25, %c0_26, %c0_27], %33 {strides = array<i32>} : memref<1x8x1xf32, #tpu.memory_space<vmem>>, vector<1x8x1xf32>,
    } else {
    }
    %c0 = arith.constant 0 : index
    %c0_1 = arith.constant 0 : index
    %c0_2 = arith.constant 0 : index
    %3 = vector.load %arg2[%c0, %c0_1, %c0_2] : memref<1x8x64xf32, #tpu.memory_space<vmem>>, vector<1x8x64xf32>
    %4 = vector.shape_cast %3 : vector<1x8x64xf32> to vector<8x64xf32>
    %cst = arith.constant 0.000000e+00 : f32
    %5 = vector.broadcast %cst : f32 to vector<8x64xf32>
    %6 = arith.maximumf %4, %5 : vector<8x64xf32>
    %c0_3 = arith.constant 0 : index
    %c0_4 = arith.constant 0 : index
    %7 = vector.load %arg3[%c0_3, %c0_4] : memref<8x8xf32, #tpu.memory_space<vmem>>, vector<8x8xf32>
    %cst_5 = arith.constant dense<0.000000e+00> : vector<8x64xf32>
    %8 = tpu.matmul %7, %6, %cst_5 {dimension_numbers = #tpu.dot_dimension_numbers<[1], [0], [0], [1], [0, 0, 1, 1], [], []>} : vector<8x8xf32>, vector<8x64xf32>, vector<8x64xf32> -> vector<8x64xf32>
    %c0_6 = arith.constant 0 : index
    %c0_7 = arith.constant 0 : index
    %c0_8 = arith.constant 0 : index
    %9 = vector.load %arg4[%c0_6, %c0_7, %c0_8] : memref<1x8x1xf32, #tpu.memory_space<vmem>>, vector<1x8x1xf32>
    %10 = vector.shape_cast %9 : vector<1x8x1xf32> to vector<8x1xf32>
    %cst_9 = arith.constant dense<0.000000e+00> : vector<8xf32>
    %11 = vector.multi_reduction <add>, %8, %cst_9 [1] : vector<8x64xf32> to vector<8xf32>
    %12 = vector.shape_cast %11 : vector<8xf32> to vector<8x1xf32>
    %13 = arith.addf %10, %12 : vector<8x1xf32>
    %c0_10 = arith.constant 0 : index
    %c0_11 = arith.constant 0 : index
    %c0_12 = arith.constant 0 : index
    %14 = vector.load %arg4[%c0_10, %c0_11, %c0_12] : memref<1x8x1xf32, #tpu.memory_space<vmem>>, vector<1x8x1xf32>
    %15 = vector.shape_cast %14 : vector<1x8x1xf32> to vector<8x1xf32>
    %16 = vector.shape_cast %13 : vector<8x1xf32> to vector<1x8x1xf32>
    tpu.vector_store %arg4[%c0_10, %c0_11, %c0_12], %16 {strides = array<i32>} : memref<1x8x1xf32, #tpu.memory_space<vmem>>, vector<1x8x1xf32>,
    %c0_13 = arith.constant 0 : index
    %c0_14 = arith.constant 0 : index
    %c0_15 = arith.constant 0 : index
    %17 = vector.load %arg5[%c0_13, %c0_14, %c0_15] : memref<1x8x1xf32, #tpu.memory_space<vmem>>, vector<1x8x1xf32>
    %18 = vector.shape_cast %17 : vector<1x8x1xf32> to vector<8x1xf32>
    %19 = arith.mulf %8, %8 : vector<8x64xf32>
    %cst_16 = arith.constant dense<0.000000e+00> : vector<8xf32>
    %20 = vector.multi_reduction <add>, %19, %cst_16 [1] : vector<8x64xf32> to vector<8xf32>
    %21 = vector.shape_cast %20 : vector<8xf32> to vector<8x1xf32>
    %22 = arith.addf %18, %21 : vector<8x1xf32>
    %c0_17 = arith.constant 0 : index
    %c0_18 = arith.constant 0 : index
    %c0_19 = arith.constant 0 : index
    %23 = vector.load %arg5[%c0_17, %c0_18, %c0_19] : memref<1x8x1xf32, #tpu.memory_space<vmem>>, vector<1x8x1xf32>
    %24 = vector.shape_cast %23 : vector<1x8x1xf32> to vector<8x1xf32>
    %25 = vector.shape_cast %22 : vector<8x1xf32> to vector<1x8x1xf32>
    tpu.vector_store %arg5[%c0_17, %c0_18, %c0_19], %25 {strides = array<i32>} : memref<1x8x1xf32, #tpu.memory_space<vmem>>, vector<1x8x1xf32>,
    return
  }
  func.func @transform_0(%arg0: i32, %arg1: i32) -> (i32, i32, i32) {
    %c0_i32 = arith.constant 0 : i32
    %c0_i32_0 = arith.constant 0 : i32
    return %arg0, %c0_i32, %arg1 : i32, i32, i32
  }
  func.func @transform_1(%arg0: i32, %arg1: i32) -> (i32, i32) {
    %c0_i32 = arith.constant 0 : i32
    %c0_i32_0 = arith.constant 0 : i32
    %c0_i32_1 = arith.constant 0 : i32
    return %c0_i32, %c0_i32_0 : i32, i32
  }
  func.func @transform_2(%arg0: i32, %arg1: i32) -> (i32, i32, i32) {
    %c0_i32 = arith.constant 0 : i32
    %c0_i32_0 = arith.constant 0 : i32
    %c0_i32_1 = arith.constant 0 : i32
    return %arg0, %c0_i32, %c0_i32_0 : i32, i32, i32
  }
  func.func @transform_3(%arg0: i32, %arg1: i32) -> (i32, i32, i32) {
    %c0_i32 = arith.constant 0 : i32
    %c0_i32_0 = arith.constant 0 : i32
    %c0_i32_1 = arith.constant 0 : i32
    return %arg0, %c0_i32, %c0_i32_0 : i32, i32, i32
  }
}

module attributes {stable_mosaic.version = 11 : i64} {
  func.func @_normalize_kernel(%arg0: i32, %arg1: i32, %arg2: memref<1x8x64xf32, #tpu.memory_space<vmem>>, %arg3: memref<8x8xf32, #tpu.memory_space<vmem>>, %arg4: memref<8x1xf32, #tpu.memory_space<vmem>>, %arg5: memref<8x1xf32, #tpu.memory_space<vmem>>, %arg6: memref<1x8x64xf32, #tpu.memory_space<vmem>>) attributes {dimension_semantics = [#tpu.dimension_semantics<parallel>, #tpu.dimension_semantics<parallel>], iteration_bounds = array<i64: 2, 1>, scalar_prefetch = 0 : i64, scratch_operands = 0 : i64, tpu.core_type = #tpu.core_type<tc>, window_params = [{transform_indices = @transform_0, window_bounds = array<i64: 1, 8, 64>}, {pipeline_mode = #tpu.pipeline_mode<synchronous>, transform_indices = @transform_1, window_bounds = array<i64: 8, 8>}, {pipeline_mode = #tpu.pipeline_mode<synchronous>, transform_indices = @transform_2, window_bounds = array<i64: 8, 1>}, {pipeline_mode = #tpu.pipeline_mode<synchronous>, transform_indices = @transform_3, window_bounds = array<i64: 8, 1>}, {transform_indices = @transform_4, window_bounds = array<i64: 1, 8, 64>}]} {
    %c0 = arith.constant 0 : index
    %c0_0 = arith.constant 0 : index
    %c0_1 = arith.constant 0 : index
    %0 = vector.load %arg2[%c0, %c0_0, %c0_1] : memref<1x8x64xf32, #tpu.memory_space<vmem>>, vector<1x8x64xf32>
    %1 = vector.shape_cast %0 : vector<1x8x64xf32> to vector<8x64xf32>
    %cst = arith.constant 0.000000e+00 : f32
    %2 = vector.broadcast %cst : f32 to vector<8x64xf32>
    %3 = arith.maximumf %1, %2 : vector<8x64xf32>
    %c0_2 = arith.constant 0 : index
    %c0_3 = arith.constant 0 : index
    %4 = vector.load %arg3[%c0_2, %c0_3] : memref<8x8xf32, #tpu.memory_space<vmem>>, vector<8x8xf32>
    %cst_4 = arith.constant dense<0.000000e+00> : vector<8x64xf32>
    %5 = tpu.matmul %4, %3, %cst_4 {dimension_numbers = #tpu.dot_dimension_numbers<[1], [0], [0], [1], [0, 0, 1, 1], [], []>} : vector<8x8xf32>, vector<8x64xf32>, vector<8x64xf32> -> vector<8x64xf32>
    %c0_5 = arith.constant 0 : index
    %c0_6 = arith.constant 0 : index
    %6 = vector.load %arg4[%c0_5, %c0_6] : memref<8x1xf32, #tpu.memory_space<vmem>>, vector<8x1xf32>
    %7 = vector.broadcast %6 : vector<8x1xf32> to vector<8x64xf32>
    %8 = arith.mulf %5, %7 : vector<8x64xf32>
    %c0_7 = arith.constant 0 : index
    %c0_8 = arith.constant 0 : index
    %9 = vector.load %arg5[%c0_7, %c0_8] : memref<8x1xf32, #tpu.memory_space<vmem>>, vector<8x1xf32>
    %10 = vector.broadcast %9 : vector<8x1xf32> to vector<8x64xf32>
    %11 = arith.addf %8, %10 : vector<8x64xf32>
    %c0_9 = arith.constant 0 : index
    %c0_10 = arith.constant 0 : index
    %c0_11 = arith.constant 0 : index
    %12 = vector.load %arg6[%c0_9, %c0_10, %c0_11] : memref<1x8x64xf32, #tpu.memory_space<vmem>>, vector<1x8x64xf32>
    %13 = vector.shape_cast %12 : vector<1x8x64xf32> to vector<8x64xf32>
    %14 = vector.shape_cast %11 : vector<8x64xf32> to vector<1x8x64xf32>
    tpu.vector_store %arg6[%c0_9, %c0_10, %c0_11], %14 {strides = array<i32>} : memref<1x8x64xf32, #tpu.memory_space<vmem>>, vector<1x8x64xf32>,
    return
  }
  func.func @transform_0(%arg0: i32, %arg1: i32) -> (i32, i32, i32) {
    %c0_i32 = arith.constant 0 : i32
    %c0_i32_0 = arith.constant 0 : i32
    return %arg0, %c0_i32, %arg1 : i32, i32, i32
  }
  func.func @transform_1(%arg0: i32, %arg1: i32) -> (i32, i32) {
    %c0_i32 = arith.constant 0 : i32
    %c0_i32_0 = arith.constant 0 : i32
    %c0_i32_1 = arith.constant 0 : i32
    return %c0_i32, %c0_i32_0 : i32, i32
  }
  func.func @transform_2(%arg0: i32, %arg1: i32) -> (i32, i32) {
    %c0_i32 = arith.constant 0 : i32
    %c0_i32_0 = arith.constant 0 : i32
    %c0_i32_1 = arith.constant 0 : i32
    return %c0_i32, %c0_i32_0 : i32, i32
  }
  func.func @transform_3(%arg0: i32, %arg1: i32) -> (i32, i32) {
    %c0_i32 = arith.constant 0 : i32
    %c0_i32_0 = arith.constant 0 : i32
    %c0_i32_1 = arith.constant 0 : i32
    return %c0_i32, %c0_i32_0 : i32, i32
  }
  func.func @transform_4(%arg0: i32, %arg1: i32) -> (i32, i32, i32) {
    %c0_i32 = arith.constant 0 : i32
    %c0_i32_0 = arith.constant 0 : i32
    return %arg0, %c0_i32, %arg1 : i32, i32, i32
  }
}

</mosaic_0001>

<llo_original>
// kernel: factorized_reduce.2
$region0: #{factorized_reduce.2}
  #allocation0 [shape = 'u32[]', space=smem, size = 0x4, offset = 0x4, fixed_abs, tag = 'smem constant byte address 0x4 - core index']
  #allocation1 [shape = 'u32[144,128]{1,0:T(1,128)}', space=vmem, size = 0x12000, scoped, tag = 'internal scratch']
  %s0 = inlined_call_operand.vmem [shape: f32[2,8,64], index: 0, kind: input, shape index: {}]
  %s1 = inlined_call_operand.vmem [shape: f32[8,8], index: 1, kind: input, shape index: {}]
  %s2 = inlined_call_operand.vmem [shape: f32[2,8,1], index: 2, kind: output, shape index: {0}]
  %s3 = inlined_call_operand.vmem [shape: f32[2,8,1], index: 3, kind: output, shape index: {1}]
  %4 = xla_tuple %s2, %s3
  %s5 = sld [smem:[#allocation0]]
  $region53: #{factorized_reduce.2} parent=0
    _
  %s7 = ssub.s32 1, %s5
  %s8 = scalar_select 0, %s7, %s5
  loop: start=0, step=1, limit=4
  $region2: #{factorized_reduce.2} parent=0 // loop_pre_header
    _
  $region3: #{factorized_reduce.2} parent=0 // loop_header
    %s10 = sphi 0, %s14
    %p11 = scmp.ge.s32.totalorder %s10, 4
    %s17 = sphi 0, %s29
    %s18 = sphi 0, %s25
    %s19 = sphi 0, %s17
    %s20 = sphi 0, %s18
    %s21 = sphi 0, %s19
    %s22 = sphi 0, %s20
    %s34 = sphi 0, %s36
    %s37 = sphi 0, %s34
    %s38 = sphi 0, %s37
    %s54 = sphi 0, %s38
    %s58 = sphi 0, %s58
    %s60 = sphi 0, %s58
    %s61 = sphi 0, %s60
    %s75 = sphi 0, %s61
    %s81 = sphi 0, %s83
    %s84 = sphi 0, %s81
    %s85 = sphi 0, %s84
    %s101 = sphi 0, %s85
    %s107 = sphi 0, %s109
    %s110 = sphi 0, %s107
    %s111 = sphi 0, %s110
    %s127 = sphi 0, %s111
  $region4: #{factorized_reduce.2} parent=0 // loop_header_branch
    %13 = sbr.rel (%p11) target = $region8
  $region5: #{factorized_reduce.2} parent=0 // loop_body
    %s15 = ssub.s32 %s10, 1
    %s16 = ssub.s32 %s10, 2
    %s23 = sadd.s32 1, %s18
    %p24 = scmp.ge.s32.totalorder %s23, 1
    %s25 = scalar_select %p24, 0, %s23
    %s26 = sadd.s32 1, %s17
    %s27 = scalar_select %p24, %s26, %s17
    %p28 = scmp.ge.s32.totalorder %s27, 2
    %s29 = scalar_select %p28, 0, %s27
    %s30 = ssub.s32 %s17, %s29
    %s31 = ssub.s32 %s18, %s25
    %s32 = sor.u32 %s30, %s31
    %p33 = scmp.eq.s32.totalorder %s32, 0
    %s35 = sadd.s32 %s34, 1
    %s36 = scalar_select %p33, %s34, %s35
    %p39 = pneg %p33
    %p40 = scmp.eq.s32.totalorder %s10, 1
    %p41 = por %p39, %p40
    %p42 = scmp.ne.s32.totalorder %s34, %s37
    %p43 = scmp.eq.s32.totalorder %s10, 0
    %p44 = por %p42, %p43
    %p45 = scmp.ne.s32.totalorder %s34, %s37
    %p46 = scmp.eq.s32.totalorder %s15, 1
    %p47 = por %p45, %p46
    %p48 = scmp.ne.s32.totalorder %s37, %s38
    %p49 = scmp.eq.s32.totalorder %s15, 0
    %p50 = por %p48, %p49
    %p51 = scmp.ne.s32.totalorder %s37, %s38
    %p52 = scmp.eq.s32.totalorder %s16, 1
    %p53 = por %p51, %p52
    %p55 = scmp.ne.s32.totalorder %s38, %s54
    %p56 = scmp.eq.s32.totalorder %s16, 0
    %p57 = por %p55, %p56
    %s59 = sadd.s32 %s58, 1
    %p62 = scmp.eq.s32.totalorder %s10, 1
    %p63 = scmp.ne.s32.totalorder %s58, %s60
    %p64 = scmp.eq.s32.totalorder %s10, 0
    %p65 = por %p63, %p64
    %p66 = scmp.ne.s32.totalorder %s58, %s60
    %p67 = scmp.eq.s32.totalorder %s15, 1
    %p68 = por %p66, %p67
    %p69 = scmp.ne.s32.totalorder %s60, %s61
    %p70 = scmp.eq.s32.totalorder %s15, 0
    %p71 = por %p69, %p70
    %p72 = scmp.ne.s32.totalorder %s60, %s61
    %p73 = scmp.eq.s32.totalorder %s16, 1
    %p74 = por %p72, %p73
    %p76 = scmp.ne.s32.totalorder %s61, %s75
    %p77 = scmp.eq.s32.totalorder %s16, 0
    %p78 = por %p76, %p77
    %s79 = ssub.s32 %s17, %s29
    %p80 = scmp.eq.s32.totalorder %s79, 0
    %s82 = sadd.s32 %s81, 1
    %s83 = scalar_select %p80, %s81, %s82
    %p86 = pneg %p80
    %p87 = scmp.eq.s32.totalorder %s10, 1
    %p88 = por %p86, %p87
    %p89 = scmp.ne.s32.totalorder %s81, %s84
    %p90 = scmp.eq.s32.totalorder %s10, 0
    %p91 = por %p89, %p90
    %p92 = scmp.ne.s32.totalorder %s81, %s84
    %p93 = scmp.eq.s32.totalorder %s15, 1
    %p94 = por %p92, %p93
    %p95 = scmp.ne.s32.totalorder %s84, %s85
    %p96 = scmp.eq.s32.totalorder %s15, 0
    %p97 = por %p95, %p96
    %p98 = scmp.ne.s32.totalorder %s84, %s85
    %p99 = scmp.eq.s32.totalorder %s16, 1
    %p100 = por %p98, %p99
    %p102 = scmp.ne.s32.totalorder %s85, %s101
    %p103 = scmp.eq.s32.totalorder %s16, 0
    %p104 = por %p102, %p103
    %s105 = ssub.s32 %s17, %s29
    %p106 = scmp.eq.s32.totalorder %s105, 0
    %s108 = sadd.s32 %s107, 1
    %s109 = scalar_select %p106, %s107, %s108
    %p112 = pneg %p106
    %p113 = scmp.eq.s32.totalorder %s10, 1
    %p114 = por %p112, %p113
    %p115 = scmp.ne.s32.totalorder %s107, %s110
    %p116 = scmp.eq.s32.totalorder %s10, 0
    %p117 = por %p115, %p116
    %p118 = scmp.ne.s32.totalorder %s107, %s110
    %p119 = scmp.eq.s32.totalorder %s15, 1
    %p120 = por %p118, %p119
    %p121 = scmp.ne.s32.totalorder %s110, %s111
    %p122 = scmp.eq.s32.totalorder %s15, 0
    %p123 = por %p121, %p122
    %p124 = scmp.ne.s32.totalorder %s110, %s111
    %p125 = scmp.eq.s32.totalorder %s16, 1
    %p126 = por %p124, %p125
    %p128 = scmp.ne.s32.totalorder %s111, %s127
    %p129 = scmp.eq.s32.totalorder %s16, 0
    %p130 = por %p128, %p129
    %p131 = scmp.le.s32.totalorder 1, %s10
    %p132 = scmp.lt.s32.totalorder %s10, 3
    %p133 = pnand %p131, %p132
    %p134 = pneg %p133
    // Predicated region
    $region9: #{factorized_reduce.2} parent=5 // pred_check
      _
    $region10: #{factorized_reduce.2} parent=5 // pred_check_branch
      %136 = sbr.rel (%p133) target = $region12
    $region11: #{factorized_reduce.2} parent=5 // pred_region
      %s137 = ssub.s32 %s10, 1
      // Predicated region
      $region13: #{factorized_reduce.2} parent=11 // pred_check
        %p138 = pneg %p71
      $region14: #{factorized_reduce.2} parent=11 // pred_check_branch
        %140 = sbr.rel (%p138) target = $region16
      $region15: #{factorized_reduce.2} parent=11 // pred_region
        _
      $region16: #{factorized_reduce.2} parent=11 // pred_fallthru
        _
    $region12: #{factorized_reduce.2} parent=5 // pred_fallthru
      _
    %p141 = scmp.lt.s32.totalorder %s10, 2
    // Predicated region
    $region17: #{factorized_reduce.2} parent=5 // pred_check
      %p142 = pneg %p141
    $region18: #{factorized_reduce.2} parent=5 // pred_check_branch
      %144 = sbr.rel (%p142) target = $region20
    $region19: #{factorized_reduce.2} parent=5 // pred_region
      // Predicated region
      $region21: #{factorized_reduce.2} parent=19 // pred_check
        %p145 = pneg %p44
      $region22: #{factorized_reduce.2} parent=19 // pred_check_branch
        %147 = sbr.rel (%p145) target = $region24
      $region23: #{factorized_reduce.2} parent=19 // pred_region
        %p148 = scmp.lt.s32.totalorder %s17, 1
        %s149 = scalar_select %p148, %s17, 1
        %p150 = scmp.lt.s32.totalorder %s18, 0
        %s151 = scalar_select %p150, %s18, 0
        %s152 = sadd.s32 %s151, %s149
        %s153 = smul.addr %s152, 8
        %s154 = scalar_lea.vmem %s0, %s153
      $region24: #{factorized_reduce.2} parent=19 // pred_fallthru
        _
    $region20: #{factorized_reduce.2} parent=5 // pred_fallthru
      _
    %p155 = scmp.le.s32.totalorder 1, %s10
    %p156 = scmp.lt.s32.totalorder %s10, 3
    %p157 = pnand %p155, %p156
    %p158 = pneg %p157
    // Predicated region
    $region25: #{factorized_reduce.2} parent=5 // pred_check
      _
    $region26: #{factorized_reduce.2} parent=5 // pred_check_branch
      %160 = sbr.rel (%p157) target = $region28
    $region27: #{factorized_reduce.2} parent=5 // pred_region
      %s161 = ssub.s32 %s10, 1
      %p162 = scmp.lt.s32.totalorder %s19, 1
      %s163 = scalar_select %p162, %s19, 1
      %p164 = scmp.lt.s32.totalorder %s20, 0
      %s165 = scalar_select %p164, %s20, 0
      %s166 = sadd.s32 %s165, %s163
      %s167 = smul.addr %s166, 8
      %s168 = scalar_lea.vmem %s0, %s167
      %p169 = pneg %p50
      %p170 = pneg %p47
      %p171 = pneg %p71
      %p172 = pneg %p68
      %p173 = pneg %p97
      %p174 = pneg %p94
      %p175 = scmp.lt.s32.totalorder %s19, 1
      %s176 = scalar_select %p175, %s19, 1
      %s177 = smul.addr %s176, 8
      %s178 = scalar_lea.vmem %s2, %s177
      %p179 = pneg %p123
      %p180 = pneg %p120
      %p181 = scmp.lt.s32.totalorder %s19, 1
      %s182 = scalar_select %p181, %s19, 1
      %s183 = smul.addr %s182, 8
      %s184 = scalar_lea.vmem %s3, %s183
      %p185 = scmp.lt.s32.totalorder %s19, 1
      %s186 = scalar_select %p185, %s19, 1
      %p187 = scmp.lt.s32.totalorder %s20, 0
      %s188 = scalar_select %p187, %s20, 0
      %s189 = sadd.s32 %s188, %s186
      %s190 = smul.addr %s189, 8
      %s191 = scalar_lea.vmem %s0, %s190
      %p192 = scmp.lt.s32.totalorder %s19, 1
      %s193 = scalar_select %p192, %s19, 1
      %s194 = smul.addr %s193, 8
      %s195 = scalar_lea.vmem %s2, %s194
      %p196 = scmp.lt.s32.totalorder %s19, 1
      %s197 = scalar_select %p196, %s19, 1
      %s198 = smul.addr %s197, 8
      %s199 = scalar_lea.vmem %s3, %s198
      %p200 = scmp.eq.s32.totalorder %s20, 0
      // Predicated region
      $region29: #{factorized_reduce.2} parent=27 // pred_check
        %p201 = pneg %p200
      $region30: #{factorized_reduce.2} parent=27 // pred_check_branch
        %203 = sbr.rel (%p201) target = $region32
      $region31: #{factorized_reduce.2} parent=27 // pred_region
        %vm204 = vcmask 7168
        %205 = vst.msk [vmem:[%s195] sm:$0xff] %vm204, 0.0
        %206 = vst.msk [vmem:[%s199] sm:$0xff] %vm204, 0.0
      $region32: #{factorized_reduce.2} parent=27 // pred_fallthru
        _
      %v207 = vld [vmem:[%s191] sm:$0xff]
      %v208 = vmax.f32 %v207, 0.0
      %v209 = vld [vmem:[%s1] sm:$0xff]
      %vm210 = vcmask 64512
      %v212 = vsel %vm210, %v209, 0
      %214 = vmatprep.subr.mxu0 0.0
      %215 = vmatpush1.msra.mxu0 0.0
      %216 = vmatprep.subr.mxu0 0.0
      %217 = vmatpush1.msra.mxu0 0.0
      %218 = vmatprep.subr.mxu0 0.0
      %219 = vmatpush1.msra.mxu0 0.0
      %220 = vmatprep.subr.mxu0 0.0
      %221 = vmatpush1.msra.mxu0 0.0
      %222 = vmatprep.subr.mxu0 0.0
      %223 = vmatpush1.msra.mxu0 0.0
      %224 = vmatprep.subr.mxu0 0.0
      %225 = vmatpush1.msra.mxu0 0.0
      %226 = vmatprep.subr.mxu0 0.0
      %227 = vmatpush1.msra.mxu0 0.0
      %228 = vmatprep.subr.mxu0 0.0
      %229 = vmatpush1.msra.mxu0 0.0
      %230 = vmatprep.subr.mxu0 0.0
      %231 = vmatpush1.msra.mxu0 0.0
      %232 = vmatprep.subr.mxu0 0.0
      %233 = vmatpush1.msra.mxu0 0.0
      %234 = vmatprep.subr.mxu0 0.0
      %235 = vmatpush1.msra.mxu0 0.0
      %236 = vmatprep.subr.mxu0 0.0
      %237 = vmatpush1.msra.mxu0 0.0
      %238 = vmatprep.subr.mxu0 0.0
      %239 = vmatpush1.msra.mxu0 0.0
      %240 = vmatprep.subr.mxu0 0.0
      %241 = vmatpush1.msra.mxu0 0.0
      %242 = vmatprep.subr.mxu0 0.0
      %243 = vmatpush1.msra.mxu0 0.0
      %244 = vmatprep.subr.mxu0 0.0
      %245 = vmatpush1.msra.mxu0 %v208
      %246 = vmatprep.subr.mxu0 0.0
      %247 = vmatpush2.msra.mxu0 0.0
      %248 = vmatprep.subr.mxu0 0.0
      %249 = vmatpush2.msra.mxu0 0.0
      %250 = vmatprep.subr.mxu0 0.0
      %251 = vmatpush2.msra.mxu0 0.0
      %252 = vmatprep.subr.mxu0 0.0
      %253 = vmatpush2.msra.mxu0 0.0
      %254 = vmatprep.subr.mxu0 0.0
      %255 = vmatpush2.msra.mxu0 0.0
      %256 = vmatprep.subr.mxu0 0.0
      %257 = vmatpush2.msra.mxu0 0.0
      %258 = vmatprep.subr.mxu0 0.0
      %259 = vmatpush2.msra.mxu0 0.0
      %260 = vmatprep.subr.mxu0 0.0
      %261 = vmatpush2.msra.mxu0 0.0
      %262 = vmatprep.subr.mxu0 0.0
      %263 = vmatpush2.msra.mxu0 0.0
      %264 = vmatprep.subr.mxu0 0.0
      %265 = vmatpush2.msra.mxu0 0.0
      %266 = vmatprep.subr.mxu0 0.0
      %267 = vmatpush2.msra.mxu0 0.0
      %268 = vmatprep.subr.mxu0 0.0
      %269 = vmatpush2.msra.mxu0 0.0
      %270 = vmatprep.subr.mxu0 0.0
      %271 = vmatpush2.msra.mxu0 0.0
      %272 = vmatprep.subr.mxu0 0.0
      %273 = vmatpush2.msra.mxu0 0.0
      %274 = vmatprep.subr.mxu0 0.0
      %275 = vmatpush2.msra.mxu0 0.0
      %276 = vmatprep.subr.mxu0 0.0
      %277 = vmatpush2.msra.mxu0 0.0
      %278 = vmatprep.mubr.f32.mxu0 0.0
      %279 = vmatmul.mubr.f32.gmra.mxu0 %v212
      %v280 = vpop.f32.mrf.mxu0
      %v281 = vadd.f32 0.0, %v280
      %v282 = vpop.f32.mrf.mxu0
      %283 = vdwg.mxu0
      %v284 = vld [vmem:[%s195] sm:$0xff]
      %vm285 = vcmask 523264
      %v286 = vsel %vm285, %v281, 0.0
      %287 = vadd.xlane.f32.xlu0 %v286
      %v288 = vpop.xlane.xlu0 %287
      %v289 = vadd.f32 %v284, %v288
      %vm290 = vcmask 7168
      %291 = vst.msk [vmem:[%s195] sm:$0xff] %vm290, %v289
      %v292 = vld [vmem:[%s199] sm:$0xff]
      %v293 = vmul.f32 %v281, %v281
      %v294 = vsel %vm285, %v293, 0.0
      %295 = vadd.xlane.f32.xlu0 %v294
      %v296 = vpop.xlane.xlu0 %295
      %v297 = vadd.f32 %v292, %v296
      %298 = vst.msk [vmem:[%s199] sm:$0xff] %vm290, %v297
      %p299 = scmp.lt.s32.totalorder %s19, 1
      %s300 = scalar_select %p299, %s19, 1
      %s301 = smul.addr %s300, 8
      %s302 = scalar_lea.vmem %s2, %s301
      %p303 = scmp.lt.s32.totalorder %s19, 1
      %s304 = scalar_select %p303, %s19, 1
      %s305 = smul.addr %s304, 8
      %s306 = scalar_lea.vmem %s3, %s305
      // Predicated region
      $region33: #{factorized_reduce.2} parent=27 // pred_check
        %p307 = pneg %p94
      $region34: #{factorized_reduce.2} parent=27 // pred_check_branch
        %309 = sbr.rel (%p307) target = $region36
      $region35: #{factorized_reduce.2} parent=27 // pred_region
        _
      $region36: #{factorized_reduce.2} parent=27 // pred_fallthru
        _
      // Predicated region
      $region37: #{factorized_reduce.2} parent=27 // pred_check
        %p310 = pneg %p120
      $region38: #{factorized_reduce.2} parent=27 // pred_check_branch
        %312 = sbr.rel (%p310) target = $region40
      $region39: #{factorized_reduce.2} parent=27 // pred_region
        _
      $region40: #{factorized_reduce.2} parent=27 // pred_fallthru
        _
    $region28: #{factorized_reduce.2} parent=5 // pred_fallthru
      _
    %p313 = scmp.le.s32.totalorder 2, %s10
    // Predicated region
    $region41: #{factorized_reduce.2} parent=5 // pred_check
      %p314 = pneg %p313
    $region42: #{factorized_reduce.2} parent=5 // pred_check_branch
      %316 = sbr.rel (%p314) target = $region44
    $region43: #{factorized_reduce.2} parent=5 // pred_region
      %s317 = ssub.s32 %s10, 2
      // Predicated region
      $region45: #{factorized_reduce.2} parent=43 // pred_check
        %p318 = pneg %p100
      $region46: #{factorized_reduce.2} parent=43 // pred_check_branch
        %320 = sbr.rel (%p318) target = $region48
      $region47: #{factorized_reduce.2} parent=43 // pred_region
        %p321 = scmp.lt.s32.totalorder %s21, 1
        %s322 = scalar_select %p321, %s21, 1
        %s323 = smul.addr %s322, 8
        %s324 = scalar_lea.vmem %s2, %s323
      $region48: #{factorized_reduce.2} parent=43 // pred_fallthru
        _
      // Predicated region
      $region49: #{factorized_reduce.2} parent=43 // pred_check
        %p325 = pneg %p126
      $region50: #{factorized_reduce.2} parent=43 // pred_check_branch
        %327 = sbr.rel (%p325) target = $region52
      $region51: #{factorized_reduce.2} parent=43 // pred_region
        %p328 = scmp.lt.s32.totalorder %s21, 1
        %s329 = scalar_select %p328, %s21, 1
        %s330 = smul.addr %s329, 8
        %s331 = scalar_lea.vmem %s3, %s330
      $region52: #{factorized_reduce.2} parent=43 // pred_fallthru
        _
    $region44: #{factorized_reduce.2} parent=5 // pred_fallthru
      _
  $region6: #{factorized_reduce.2} parent=0 // loop_footer
    %s14 = sadd.s32 1, %s10
  $region7: #{factorized_reduce.2} parent=0 // loop_footer_branch
    %9 = sbr.rel target = $region3
  $region8: #{factorized_reduce.2} parent=0 // loop_exit
    _

// kernel: factorized_reduce.3
$region0: #{factorized_reduce.3}
  #allocation0 [shape = 'u32[]', space=smem, size = 0x4, offset = 0x4, fixed_abs, tag = 'smem constant byte address 0x4 - core index']
  #allocation1 [shape = 'u32[144,128]{1,0:T(1,128)}', space=vmem, size = 0x12000, scoped, tag = 'internal scratch']
  %s0 = inlined_call_operand.vmem [shape: f32[2,8,64], index: 0, kind: input, shape index: {}]
  %s1 = inlined_call_operand.vmem [shape: f32[8,8], index: 1, kind: input, shape index: {}]
  %s2 = inlined_call_operand.vmem [shape: f32[8,1], index: 2, kind: input, shape index: {}]
  %s3 = inlined_call_operand.vmem [shape: f32[8,1], index: 3, kind: input, shape index: {}]
  %s4 = inlined_call_operand.vmem [shape: f32[2,8,64], index: 4, kind: output, shape index: {}]
  %s5 = sld [smem:[#allocation0]]
  $region49: #{factorized_reduce.3} parent=0
    _
  %s7 = ssub.s32 1, %s5
  %s8 = scalar_select 0, %s7, %s5
  loop: start=0, step=1, limit=4
  $region2: #{factorized_reduce.3} parent=0 // loop_pre_header
    _
  $region3: #{factorized_reduce.3} parent=0 // loop_header
    %s10 = sphi 0, %s14
    %p11 = scmp.ge.s32.totalorder %s10, 4
    %s17 = sphi 0, %s29
    %s18 = sphi 0, %s25
    %s19 = sphi 0, %s17
    %s20 = sphi 0, %s18
    %s21 = sphi 0, %s19
    %s22 = sphi 0, %s20
    %s34 = sphi 0, %s36
    %s37 = sphi 0, %s34
    %s38 = sphi 0, %s37
    %s54 = sphi 0, %s38
    %s58 = sphi 0, %s58
    %s60 = sphi 0, %s58
    %s61 = sphi 0, %s60
    %s75 = sphi 0, %s61
    %s79 = sphi 0, %s79
    %s81 = sphi 0, %s79
    %s82 = sphi 0, %s81
    %s96 = sphi 0, %s82
    %s100 = sphi 0, %s100
    %s102 = sphi 0, %s100
    %s103 = sphi 0, %s102
    %s117 = sphi 0, %s103
    %s125 = sphi 0, %s127
    %s128 = sphi 0, %s125
    %s129 = sphi 0, %s128
    %s145 = sphi 0, %s129
  $region4: #{factorized_reduce.3} parent=0 // loop_header_branch
    %13 = sbr.rel (%p11) target = $region8
  $region5: #{factorized_reduce.3} parent=0 // loop_body
    %s15 = ssub.s32 %s10, 1
    %s16 = ssub.s32 %s10, 2
    %s23 = sadd.s32 1, %s18
    %p24 = scmp.ge.s32.totalorder %s23, 1
    %s25 = scalar_select %p24, 0, %s23
    %s26 = sadd.s32 1, %s17
    %s27 = scalar_select %p24, %s26, %s17
    %p28 = scmp.ge.s32.totalorder %s27, 2
    %s29 = scalar_select %p28, 0, %s27
    %s30 = ssub.s32 %s17, %s29
    %s31 = ssub.s32 %s18, %s25
    %s32 = sor.u32 %s30, %s31
    %p33 = scmp.eq.s32.totalorder %s32, 0
    %s35 = sadd.s32 %s34, 1
    %s36 = scalar_select %p33, %s34, %s35
    %p39 = pneg %p33
    %p40 = scmp.eq.s32.totalorder %s10, 1
    %p41 = por %p39, %p40
    %p42 = scmp.ne.s32.totalorder %s34, %s37
    %p43 = scmp.eq.s32.totalorder %s10, 0
    %p44 = por %p42, %p43
    %p45 = scmp.ne.s32.totalorder %s34, %s37
    %p46 = scmp.eq.s32.totalorder %s15, 1
    %p47 = por %p45, %p46
    %p48 = scmp.ne.s32.totalorder %s37, %s38
    %p49 = scmp.eq.s32.totalorder %s15, 0
    %p50 = por %p48, %p49
    %p51 = scmp.ne.s32.totalorder %s37, %s38
    %p52 = scmp.eq.s32.totalorder %s16, 1
    %p53 = por %p51, %p52
    %p55 = scmp.ne.s32.totalorder %s38, %s54
    %p56 = scmp.eq.s32.totalorder %s16, 0
    %p57 = por %p55, %p56
    %s59 = sadd.s32 %s58, 1
    %p62 = scmp.eq.s32.totalorder %s10, 1
    %p63 = scmp.ne.s32.totalorder %s58, %s60
    %p64 = scmp.eq.s32.totalorder %s10, 0
    %p65 = por %p63, %p64
    %p66 = scmp.ne.s32.totalorder %s58, %s60
    %p67 = scmp.eq.s32.totalorder %s15, 1
    %p68 = por %p66, %p67
    %p69 = scmp.ne.s32.totalorder %s60, %s61
    %p70 = scmp.eq.s32.totalorder %s15, 0
    %p71 = por %p69, %p70
    %p72 = scmp.ne.s32.totalorder %s60, %s61
    %p73 = scmp.eq.s32.totalorder %s16, 1
    %p74 = por %p72, %p73
    %p76 = scmp.ne.s32.totalorder %s61, %s75
    %p77 = scmp.eq.s32.totalorder %s16, 0
    %p78 = por %p76, %p77
    %s80 = sadd.s32 %s79, 1
    %p83 = scmp.eq.s32.totalorder %s10, 1
    %p84 = scmp.ne.s32.totalorder %s79, %s81
    %p85 = scmp.eq.s32.totalorder %s10, 0
    %p86 = por %p84, %p85
    %p87 = scmp.ne.s32.totalorder %s79, %s81
    %p88 = scmp.eq.s32.totalorder %s15, 1
    %p89 = por %p87, %p88
    %p90 = scmp.ne.s32.totalorder %s81, %s82
    %p91 = scmp.eq.s32.totalorder %s15, 0
    %p92 = por %p90, %p91
    %p93 = scmp.ne.s32.totalorder %s81, %s82
    %p94 = scmp.eq.s32.totalorder %s16, 1
    %p95 = por %p93, %p94
    %p97 = scmp.ne.s32.totalorder %s82, %s96
    %p98 = scmp.eq.s32.totalorder %s16, 0
    %p99 = por %p97, %p98
    %s101 = sadd.s32 %s100, 1
    %p104 = scmp.eq.s32.totalorder %s10, 1
    %p105 = scmp.ne.s32.totalorder %s100, %s102
    %p106 = scmp.eq.s32.totalorder %s10, 0
    %p107 = por %p105, %p106
    %p108 = scmp.ne.s32.totalorder %s100, %s102
    %p109 = scmp.eq.s32.totalorder %s15, 1
    %p110 = por %p108, %p109
    %p111 = scmp.ne.s32.totalorder %s102, %s103
    %p112 = scmp.eq.s32.totalorder %s15, 0
    %p113 = por %p111, %p112
    %p114 = scmp.ne.s32.totalorder %s102, %s103
    %p115 = scmp.eq.s32.totalorder %s16, 1
    %p116 = por %p114, %p115
    %p118 = scmp.ne.s32.totalorder %s103, %s117
    %p119 = scmp.eq.s32.totalorder %s16, 0
    %p120 = por %p118, %p119
    %s121 = ssub.s32 %s17, %s29
    %s122 = ssub.s32 %s18, %s25
    %s123 = sor.u32 %s121, %s122
    %p124 = scmp.eq.s32.totalorder %s123, 0
    %s126 = sadd.s32 %s125, 1
    %s127 = scalar_select %p124, %s125, %s126
    %p130 = pneg %p124
    %p131 = scmp.eq.s32.totalorder %s10, 1
    %p132 = por %p130, %p131
    %p133 = scmp.ne.s32.totalorder %s125, %s128
    %p134 = scmp.eq.s32.totalorder %s10, 0
    %p135 = por %p133, %p134
    %p136 = scmp.ne.s32.totalorder %s125, %s128
    %p137 = scmp.eq.s32.totalorder %s15, 1
    %p138 = por %p136, %p137
    %p139 = scmp.ne.s32.totalorder %s128, %s129
    %p140 = scmp.eq.s32.totalorder %s15, 0
    %p141 = por %p139, %p140
    %p142 = scmp.ne.s32.totalorder %s128, %s129
    %p143 = scmp.eq.s32.totalorder %s16, 1
    %p144 = por %p142, %p143
    %p146 = scmp.ne.s32.totalorder %s129, %s145
    %p147 = scmp.eq.s32.totalorder %s16, 0
    %p148 = por %p146, %p147
    %p149 = scmp.le.s32.totalorder 1, %s10
    %p150 = scmp.lt.s32.totalorder %s10, 3
    %p151 = pnand %p149, %p150
    %p152 = pneg %p151
    // Predicated region
    $region9: #{factorized_reduce.3} parent=5 // pred_check
      _
    $region10: #{factorized_reduce.3} parent=5 // pred_check_branch
      %154 = sbr.rel (%p151) target = $region12
    $region11: #{factorized_reduce.3} parent=5 // pred_region
      %s155 = ssub.s32 %s10, 1
      // Predicated region
      $region13: #{factorized_reduce.3} parent=11 // pred_check
        %p156 = pneg %p71
      $region14: #{factorized_reduce.3} parent=11 // pred_check_branch
        %158 = sbr.rel (%p156) target = $region16
      $region15: #{factorized_reduce.3} parent=11 // pred_region
        _
      $region16: #{factorized_reduce.3} parent=11 // pred_fallthru
        _
      // Predicated region
      $region17: #{factorized_reduce.3} parent=11 // pred_check
        %p159 = pneg %p92
      $region18: #{factorized_reduce.3} parent=11 // pred_check_branch
        %161 = sbr.rel (%p159) target = $region20
      $region19: #{factorized_reduce.3} parent=11 // pred_region
        _
      $region20: #{factorized_reduce.3} parent=11 // pred_fallthru
        _
      // Predicated region
      $region21: #{factorized_reduce.3} parent=11 // pred_check
        %p162 = pneg %p113
      $region22: #{factorized_reduce.3} parent=11 // pred_check_branch
        %164 = sbr.rel (%p162) target = $region24
      $region23: #{factorized_reduce.3} parent=11 // pred_region
        _
      $region24: #{factorized_reduce.3} parent=11 // pred_fallthru
        _
    $region12: #{factorized_reduce.3} parent=5 // pred_fallthru
      _
    %p165 = scmp.lt.s32.totalorder %s10, 2
    // Predicated region
    $region25: #{factorized_reduce.3} parent=5 // pred_check
      %p166 = pneg %p165
    $region26: #{factorized_reduce.3} parent=5 // pred_check_branch
      %168 = sbr.rel (%p166) target = $region28
    $region27: #{factorized_reduce.3} parent=5 // pred_region
      // Predicated region
      $region29: #{factorized_reduce.3} parent=27 // pred_check
        %p169 = pneg %p44
      $region30: #{factorized_reduce.3} parent=27 // pred_check_branch
        %171 = sbr.rel (%p169) target = $region32
      $region31: #{factorized_reduce.3} parent=27 // pred_region
        %p172 = scmp.lt.s32.totalorder %s17, 1
        %s173 = scalar_select %p172, %s17, 1
        %p174 = scmp.lt.s32.totalorder %s18, 0
        %s175 = scalar_select %p174, %s18, 0
        %s176 = sadd.s32 %s175, %s173
        %s177 = smul.addr %s176, 8
        %s178 = scalar_lea.vmem %s0, %s177
      $region32: #{factorized_reduce.3} parent=27 // pred_fallthru
        _
    $region28: #{factorized_reduce.3} parent=5 // pred_fallthru
      _
    %p179 = scmp.le.s32.totalorder 1, %s10
    %p180 = scmp.lt.s32.totalorder %s10, 3
    %p181 = pnand %p179, %p180
    %p182 = pneg %p181
    // Predicated region
    $region33: #{factorized_reduce.3} parent=5 // pred_check
      _
    $region34: #{factorized_reduce.3} parent=5 // pred_check_branch
      %184 = sbr.rel (%p181) target = $region36
    $region35: #{factorized_reduce.3} parent=5 // pred_region
      %s185 = ssub.s32 %s10, 1
      %p186 = scmp.lt.s32.totalorder %s19, 1
      %s187 = scalar_select %p186, %s19, 1
      %p188 = scmp.lt.s32.totalorder %s20, 0
      %s189 = scalar_select %p188, %s20, 0
      %s190 = sadd.s32 %s189, %s187
      %s191 = smul.addr %s190, 8
      %s192 = scalar_lea.vmem %s0, %s191
      %p193 = pneg %p50
      %p194 = pneg %p47
      %p195 = pneg %p71
      %p196 = pneg %p68
      %p197 = pneg %p92
      %p198 = pneg %p89
      %p199 = pneg %p113
      %p200 = pneg %p110
      %p201 = pneg %p141
      %p202 = pneg %p138
      %p203 = scmp.lt.s32.totalorder %s19, 1
      %s204 = scalar_select %p203, %s19, 1
      %p205 = scmp.lt.s32.totalorder %s20, 0
      %s206 = scalar_select %p205, %s20, 0
      %s207 = sadd.s32 %s206, %s204
      %s208 = smul.addr %s207, 8
      %s209 = scalar_lea.vmem %s4, %s208
      %p210 = scmp.lt.s32.totalorder %s19, 1
      %s211 = scalar_select %p210, %s19, 1
      %p212 = scmp.lt.s32.totalorder %s20, 0
      %s213 = scalar_select %p212, %s20, 0
      %s214 = sadd.s32 %s213, %s211
      %s215 = smul.addr %s214, 8
      %s216 = scalar_lea.vmem %s0, %s215
      %p217 = scmp.lt.s32.totalorder %s19, 1
      %s218 = scalar_select %p217, %s19, 1
      %p219 = scmp.lt.s32.totalorder %s20, 0
      %s220 = scalar_select %p219, %s20, 0
      %s221 = sadd.s32 %s220, %s218
      %s222 = smul.addr %s221, 8
      %s223 = scalar_lea.vmem %s4, %s222
      %v224 = vld [vmem:[%s216] sm:$0xff]
      %v225 = vmax.f32 %v224, 0.0
      %v226 = vld [vmem:[%s1] sm:$0xff]
      %vm227 = vcmask 64512
      %v229 = vsel %vm227, %v226, 0
      %231 = vmatprep.subr.mxu0 0.0
      %232 = vmatpush1.msra.mxu0 0.0
      %233 = vmatprep.subr.mxu0 0.0
      %234 = vmatpush1.msra.mxu0 0.0
      %235 = vmatprep.subr.mxu0 0.0
      %236 = vmatpush1.msra.mxu0 0.0
      %237 = vmatprep.subr.mxu0 0.0
      %238 = vmatpush1.msra.mxu0 0.0
      %239 = vmatprep.subr.mxu0 0.0
      %240 = vmatpush1.msra.mxu0 0.0
      %241 = vmatprep.subr.mxu0 0.0
      %242 = vmatpush1.msra.mxu0 0.0
      %243 = vmatprep.subr.mxu0 0.0
      %244 = vmatpush1.msra.mxu0 0.0
      %245 = vmatprep.subr.mxu0 0.0
      %246 = vmatpush1.msra.mxu0 0.0
      %247 = vmatprep.subr.mxu0 0.0
      %248 = vmatpush1.msra.mxu0 0.0
      %249 = vmatprep.subr.mxu0 0.0
      %250 = vmatpush1.msra.mxu0 0.0
      %251 = vmatprep.subr.mxu0 0.0
      %252 = vmatpush1.msra.mxu0 0.0
      %253 = vmatprep.subr.mxu0 0.0
      %254 = vmatpush1.msra.mxu0 0.0
      %255 = vmatprep.subr.mxu0 0.0
      %256 = vmatpush1.msra.mxu0 0.0
      %257 = vmatprep.subr.mxu0 0.0
      %258 = vmatpush1.msra.mxu0 0.0
      %259 = vmatprep.subr.mxu0 0.0
      %260 = vmatpush1.msra.mxu0 0.0
      %261 = vmatprep.subr.mxu0 0.0
      %262 = vmatpush1.msra.mxu0 %v225
      %263 = vmatprep.subr.mxu0 0.0
      %264 = vmatpush2.msra.mxu0 0.0
      %265 = vmatprep.subr.mxu0 0.0
      %266 = vmatpush2.msra.mxu0 0.0
      %267 = vmatprep.subr.mxu0 0.0
      %268 = vmatpush2.msra.mxu0 0.0
      %269 = vmatprep.subr.mxu0 0.0
      %270 = vmatpush2.msra.mxu0 0.0
      %271 = vmatprep.subr.mxu0 0.0
      %272 = vmatpush2.msra.mxu0 0.0
      %273 = vmatprep.subr.mxu0 0.0
      %274 = vmatpush2.msra.mxu0 0.0
      %275 = vmatprep.subr.mxu0 0.0
      %276 = vmatpush2.msra.mxu0 0.0
      %277 = vmatprep.subr.mxu0 0.0
      %278 = vmatpush2.msra.mxu0 0.0
      %279 = vmatprep.subr.mxu0 0.0
      %280 = vmatpush2.msra.mxu0 0.0
      %281 = vmatprep.subr.mxu0 0.0
      %282 = vmatpush2.msra.mxu0 0.0
      %283 = vmatprep.subr.mxu0 0.0
      %284 = vmatpush2.msra.mxu0 0.0
      %285 = vmatprep.subr.mxu0 0.0
      %286 = vmatpush2.msra.mxu0 0.0
      %287 = vmatprep.subr.mxu0 0.0
      %288 = vmatpush2.msra.mxu0 0.0
      %289 = vmatprep.subr.mxu0 0.0
      %290 = vmatpush2.msra.mxu0 0.0
      %291 = vmatprep.subr.mxu0 0.0
      %292 = vmatpush2.msra.mxu0 0.0
      %293 = vmatprep.subr.mxu0 0.0
      %294 = vmatpush2.msra.mxu0 0.0
      %295 = vmatprep.mubr.f32.mxu0 0.0
      %296 = vmatmul.mubr.f32.gmra.mxu0 %v229
      %v297 = vpop.f32.mrf.mxu0
      %v298 = vadd.f32 0.0, %v297
      %v299 = vpop.f32.mrf.mxu0
      %300 = vdwg.mxu0
      %v301 = vld [vmem:[%s2] sm:$0xff]
      %303 = vset.pattern.permute.xlu0 0
      %304 = vperm.xlu0 %303, %v301
      %v305 = vpop.permute.xlu0 %304
      %v307 = vmul.f32 %v298, %v305
      %v308 = vld [vmem:[%s3] sm:$0xff]
      %310 = vset.pattern.permute.xlu0 0
      %311 = vperm.xlu0 %310, %v308
      %v312 = vpop.permute.xlu0 %311
      %v314 = vadd.f32 %v307, %v312
      %vm315 = vcmask 523264
      %316 = vst.msk [vmem:[%s223] sm:$0xff] %vm315, %v314
      %p317 = scmp.lt.s32.totalorder %s19, 1
      %s318 = scalar_select %p317, %s19, 1
      %p319 = scmp.lt.s32.totalorder %s20, 0
      %s320 = scalar_select %p319, %s20, 0
      %s321 = sadd.s32 %s320, %s318
      %s322 = smul.addr %s321, 8
      %s323 = scalar_lea.vmem %s4, %s322
      // Predicated region
      $region37: #{factorized_reduce.3} parent=35 // pred_check
        %p324 = pneg %p138
      $region38: #{factorized_reduce.3} parent=35 // pred_check_branch
        %326 = sbr.rel (%p324) target = $region40
      $region39: #{factorized_reduce.3} parent=35 // pred_region
        _
      $region40: #{factorized_reduce.3} parent=35 // pred_fallthru
        _
    $region36: #{factorized_reduce.3} parent=5 // pred_fallthru
      _
    %p327 = scmp.le.s32.totalorder 2, %s10
    // Predicated region
    $region41: #{factorized_reduce.3} parent=5 // pred_check
      %p328 = pneg %p327
    $region42: #{factorized_reduce.3} parent=5 // pred_check_branch
      %330 = sbr.rel (%p328) target = $region44
    $region43: #{factorized_reduce.3} parent=5 // pred_region
      %s331 = ssub.s32 %s10, 2
      // Predicated region
      $region45: #{factorized_reduce.3} parent=43 // pred_check
        %p332 = pneg %p144
      $region46: #{factorized_reduce.3} parent=43 // pred_check_branch
        %334 = sbr.rel (%p332) target = $region48
      $region47: #{factorized_reduce.3} parent=43 // pred_region
        %p335 = scmp.lt.s32.totalorder %s21, 1
        %s336 = scalar_select %p335, %s21, 1
        %p337 = scmp.lt.s32.totalorder %s22, 0
        %s338 = scalar_select %p337, %s22, 0
        %s339 = sadd.s32 %s338, %s336
        %s340 = smul.addr %s339, 8
        %s341 = scalar_lea.vmem %s4, %s340
      $region48: #{factorized_reduce.3} parent=43 // pred_fallthru
        _
    $region44: #{factorized_reduce.3} parent=5 // pred_fallthru
      _
  $region6: #{factorized_reduce.3} parent=0 // loop_footer
    %s14 = sadd.s32 1, %s10
  $region7: #{factorized_reduce.3} parent=0 // loop_footer_branch
    %9 = sbr.rel target = $region3
  $region8: #{factorized_reduce.3} parent=0 // loop_exit
    _

</llo_original>
